<compile_context>
chip_gen: v5e
topology: v5e:2x2
jax: 0.10.0
libtpu: 0.0.40
codegen_flags: <defaults>
</compile_context>

<pallas_src>
import functools
import math

import jax
import jax.numpy as jnp
from jax.experimental import pallas as pl
from jax.experimental.pallas import tpu as pltpu


def _cdiv(a, b):
    return -(-a // b)


def _softmax_last(v, *, approx):
    """Numerically stable softmax over the last axis (== F.softmax(dim=1))."""
    m = jnp.max(v, axis=-1, keepdims=True)
    e = jnp.exp(v - m)
    s = jnp.sum(e, axis=-1, keepdims=True)
    if approx:
        return e * pl.reciprocal(s, approx=True)   # EUP slot, ~free next to exp
    return e / s


def densenet_kernel(x_ref,
                    w1_ref, b1_ref, w2_ref, b2_ref, w3_ref, b3_ref,
                    w4_ref, b4_ref, wh_ref, bh_ref,
                    ua_ori_ref, ua_de_ref, ua_st_ref, pc_ref,
                    z5_scratch, *, uen, apn):
    f32 = jnp.float32
    bf16 = jnp.bfloat16

    # L1..L4 + ReLU.  Weights are bf16 in VMEM; cast the tiny (1, H) activation
    # to bf16 at the MXU input so the matmul runs natively in bf16 with f32
    # accumulation (no f32 weight copy is ever materialized).
    h = x_ref[...]                                                  # (1, Din) f32
    for w_ref, b_ref in ((w1_ref, b1_ref), (w2_ref, b2_ref),
                         (w3_ref, b3_ref), (w4_ref, b4_ref)):
        h = jnp.maximum(
            jnp.dot(h.astype(bf16), w_ref[...],
                    preferred_element_type=f32) + b_ref[...], 0.0)   # f32

    # Fused L5+L6 head: one (1, H) @ (H, UEn*APn + APn) matvec.
    z = jnp.dot(h.astype(bf16), wh_ref[...],
                preferred_element_type=f32) + bh_ref[...]            # (1, NA+APn)
    na = uen * apn

    # Scatter the flat L5 logits into a (UEn, APn) scratch (one cheap row store
    # per user) so the three softmaxes run vectorized over all users at once.
    for u in range(uen):                                             # static unroll
        z5_scratch[pl.ds(u, 1), :] = z[:, u * apn:(u + 1) * apn]
    z5 = z5_scratch[...]                                             # (UEn, APn)

    # Exact divide for `ori` (it feeds the 1e4-scaled softmax, which amplifies
    # any denominator error 1e4x); approx reciprocal for the terminal heads.
    ori = _softmax_last(z5, approx=False)
    ua_ori_ref[...] = ori
    ua_de_ref[...] = _softmax_last(ori * 10000.0, approx=True)
    ua_st_ref[...] = _softmax_last(ori, approx=True)

    # L6 head + sigmoid (manual form so the divide lands on the EUP).
    z6 = z[:, na:na + apn]                                           # (1, APn)
    pc_ref[...] = pl.reciprocal(1.0 + jnp.exp(-z6), approx=True)


def _vmem_padded_bytes(shape, dtype):
    """Approximate VMEM footprint of a 2-D array ((sublane, 128-lane) tiling)."""
    itemsize = jnp.dtype(dtype).itemsize
    sublane = {4: 8, 2: 16, 1: 32}.get(itemsize, 8)
    rows = int(math.prod(shape[:-1])) if len(shape) > 1 else 1
    cols = shape[-1]
    return _cdiv(rows, sublane) * sublane * _cdiv(cols, 128) * 128 * itemsize


def densenet_forward(x, kernel_params, uen, apn):
    """x: any array with (UEn+1)*APn elements (flattened inside, like PyTorch)."""
    din = x.size
    x_row = x.reshape(1, din).astype(jnp.float32)
    (w1, b1, w2, b2, w3, b3, w4, b4, wh, bh) = kernel_params
    inputs = (x_row, w1, b1, w2, b2, w3, b3, w4, b4, wh, bh)

    vmem = pl.BlockSpec(memory_space=pltpu.MemorySpace.VMEM)
    out_shapes = (
        jax.ShapeDtypeStruct((uen, apn), jnp.float32),   # UAoutcome_ori
        jax.ShapeDtypeStruct((uen, apn), jnp.float32),   # UAoutcome_de
        jax.ShapeDtypeStruct((uen, apn), jnp.float32),   # UAoutcome_st
        jax.ShapeDtypeStruct((1, apn), jnp.float32),     # PCoutcome (row vec)
    )

    # --- VMEM budget (lane-padded resident set + headroom) -------------------
    resident = sum(_vmem_padded_bytes(a.shape, a.dtype) for a in inputs)
    resident += sum(_vmem_padded_bytes(s.shape, s.dtype) for s in out_shapes)
    resident += _vmem_padded_bytes((uen, apn), jnp.float32)          # scratch
    vmem_limit = min(max(int(resident * 1.5) + (2 << 20), 16 << 20), 120 << 20)

    # --- Cost estimate (the kernel is HBM-bandwidth bound at batch 1) --------
    h1, h2, h3, h4 = w1.shape[1], w2.shape[1], w3.shape[1], w4.shape[1]
    nh = uen * apn + apn
    flops = 2 * (din * h1 + h1 * h2 + h2 * h3 + h3 * h4 + h4 * nh)
    transcendentals = 3 * uen * apn + apn + 3 * uen + apn
    bytes_accessed = (sum(a.size * a.dtype.itemsize for a in inputs)
                      + sum(int(math.prod(s.shape)) * 4 for s in out_shapes))

    ua_ori, ua_de, ua_st, pc = pl.pallas_call(
        functools.partial(densenet_kernel, uen=uen, apn=apn),
        out_shape=out_shapes,
        in_specs=[vmem] * len(inputs),
        out_specs=(vmem, vmem, vmem, vmem),
        scratch_shapes=[pltpu.VMEM((uen, apn), jnp.float32)],
        compiler_params=pltpu.CompilerParams(vmem_limit_bytes=vmem_limit),
        cost_estimate=pl.CostEstimate(flops=flops,
                                      transcendentals=transcendentals,
                                      bytes_accessed=bytes_accessed),
    )(*inputs)
    return ua_ori, ua_de, ua_st, pc[0]                   # PCoutcome -> (APn,)


def init_params(key, apn, uen, hidden):
    """PyTorch-default-style init.  Returns
    (reference params: bf16-quantized weights as f32, unfused) and
    (kernel params: bf16 weights, f32 biases, fused L5+L6 head)."""
    din = (uen + 1) * apn

    def linear(kw, kb, fan_in, fan_out):
        bound = 1.0 / math.sqrt(fan_in)
        w = jax.random.uniform(kw, (fan_in, fan_out), jnp.float32, -bound, bound)
        b = jax.random.uniform(kb, (fan_out,), jnp.float32, -bound, bound)
        return w, b

    keys = jax.random.split(key, 12)
    w1, b1 = linear(keys[0], keys[1], din, hidden[0])
    w2, b2 = linear(keys[2], keys[3], hidden[0], hidden[1])
    w3, b3 = linear(keys[4], keys[5], hidden[1], hidden[2])
    w4, b4 = linear(keys[6], keys[7], hidden[2], hidden[3])
    w5, b5 = linear(keys[8], keys[9], hidden[3], uen * apn)
    w6, b6 = linear(keys[10], keys[11], hidden[3], apn)

    bf16 = jnp.bfloat16
    # Fused head: (H, UEn*APn + APn), bias (1, UEn*APn + APn).
    wh = jnp.concatenate([w5, w6], axis=1).astype(bf16)
    bh = jnp.concatenate([b5, b6]).reshape(1, -1)
    kern = (w1.astype(bf16), b1.reshape(1, -1),
            w2.astype(bf16), b2.reshape(1, -1),
            w3.astype(bf16), b3.reshape(1, -1),
            w4.astype(bf16), b4.reshape(1, -1),
            wh, bh)

    # Reference uses the SAME bf16-quantized weights so the pure-JAX check
    # validates the kernel against identical arithmetic inputs.
    ref = (w1.astype(bf16), b1, w2.astype(bf16), b2, w3.astype(bf16), b3,
           w4.astype(bf16), b4, w5.astype(bf16), b5, w6.astype(bf16), b6)
    return ref, kern


def reference_forward(x, ref_params, uen, apn):
    """Pure-JAX reference with the same bf16-weight / f32-accumulate recipe."""
    (w1, b1, w2, b2, w3, b3, w4, b4, w5, b5, w6, b6) = ref_params
    bf16 = jnp.bfloat16

    def dense(h, w, b):
        return jnp.dot(h.astype(bf16), w, preferred_element_type=jnp.float32) + b

    v = x.reshape(1, -1).astype(jnp.float32)
    h = jax.nn.relu(dense(v, w1, b1))
    h = jax.nn.relu(dense(h, w2, b2))
    h = jax.nn.relu(dense(h, w3, b3))
    h = jax.nn.relu(dense(h, w4, b4))
    z5 = dense(h, w5, b5).reshape(uen, apn)
    ori = jax.nn.softmax(z5, axis=1)
    de = jax.nn.softmax(ori * 10000.0, axis=1)
    st = jax.nn.softmax(ori, axis=1)
    pc = jax.nn.sigmoid(dense(h, w6, b6))[0]
    return ori, de, st, pc


if __name__ == "__main__":
    APn, UEn = 4, 8
    hidden = [256, 256, 256, 256]            # small stand-in for [2048]*4

    key = jax.random.PRNGKey(0)
    k_x, k_p = jax.random.split(key)
    x = jax.random.normal(k_x, (UEn + 1, APn), jnp.float32)   # flattened inside

    ref_params, kern_params = init_params(k_p, APn, UEn, hidden)

    outs = jax.block_until_ready(densenet_forward(x, kern_params, UEn, APn))
    ua_ori, ua_de, ua_st, pc = outs

    ref_ori, ref_de, ref_st, ref_pc = reference_forward(x, ref_params, UEn, APn)

    assert ua_ori.shape == (UEn, APn) and ua_de.shape == (UEn, APn)
    assert ua_st.shape == (UEn, APn) and pc.shape == (APn,)
    assert jnp.allclose(jnp.sum(ua_ori, axis=1), 1.0, atol=1e-4)
    assert jnp.allclose(ua_ori, ref_ori, atol=2e-3)
    assert jnp.allclose(ua_st, ref_st, atol=5e-3)
    assert jnp.allclose(pc, ref_pc, atol=5e-3)
    # ua_de is softmax of 1e4-scaled probabilities (≈ one-hot) -> loose tol
    assert jnp.allclose(ua_de, ref_de, atol=5e-2)

    print("KERNEL_OK")
</pallas_src>

<mosaic_0001>
module attributes {stable_mosaic.version = 11 : i64} {
  func.func @densenet_kernel(%arg0: memref<1x36xf32, #tpu.memory_space<vmem>>, %arg1: memref<36x256xbf16, #tpu.memory_space<vmem>>, %arg2: memref<1x256xf32, #tpu.memory_space<vmem>>, %arg3: memref<256x256xbf16, #tpu.memory_space<vmem>>, %arg4: memref<1x256xf32, #tpu.memory_space<vmem>>, %arg5: memref<256x256xbf16, #tpu.memory_space<vmem>>, %arg6: memref<1x256xf32, #tpu.memory_space<vmem>>, %arg7: memref<256x256xbf16, #tpu.memory_space<vmem>>, %arg8: memref<1x256xf32, #tpu.memory_space<vmem>>, %arg9: memref<256x36xbf16, #tpu.memory_space<vmem>>, %arg10: memref<1x36xf32, #tpu.memory_space<vmem>>, %arg11: memref<8x4xf32, #tpu.memory_space<vmem>>, %arg12: memref<8x4xf32, #tpu.memory_space<vmem>>, %arg13: memref<8x4xf32, #tpu.memory_space<vmem>>, %arg14: memref<1x4xf32, #tpu.memory_space<vmem>>, %arg15: memref<8x4xf32, #tpu.memory_space<vmem>>) attributes {dimension_semantics = [], scalar_prefetch = 0 : i64, scratch_operands = 1 : i64, tpu.core_type = #tpu.core_type<tc>} {
    %c0 = arith.constant 0 : index
    %c0_0 = arith.constant 0 : index
    %0 = vector.load %arg0[%c0, %c0_0] : memref<1x36xf32, #tpu.memory_space<vmem>>, vector<1x36xf32>
    %1 = arith.truncf %0 : vector<1x36xf32> to vector<1x36xbf16>
    %c0_1 = arith.constant 0 : index
    %c0_2 = arith.constant 0 : index
    %2 = vector.load %arg1[%c0_1, %c0_2] : memref<36x256xbf16, #tpu.memory_space<vmem>>, vector<36x256xbf16>
    %cst = arith.constant dense<0.000000e+00> : vector<1x256xf32>
    %3 = tpu.matmul %1, %2, %cst {dimension_numbers = #tpu.dot_dimension_numbers<[1], [0], [0], [1], [0, 0, 1, 1], [], []>} : vector<1x36xbf16>, vector<36x256xbf16>, vector<1x256xf32> -> vector<1x256xf32>
    %c0_3 = arith.constant 0 : index
    %c0_4 = arith.constant 0 : index
    %4 = vector.load %arg2[%c0_3, %c0_4] : memref<1x256xf32, #tpu.memory_space<vmem>>, vector<1x256xf32>
    %5 = arith.addf %3, %4 : vector<1x256xf32>
    %cst_5 = arith.constant 0.000000e+00 : f32
    %6 = vector.broadcast %cst_5 : f32 to vector<1x256xf32>
    %7 = arith.maximumf %5, %6 : vector<1x256xf32>
    %8 = arith.truncf %7 : vector<1x256xf32> to vector<1x256xbf16>
    %c0_6 = arith.constant 0 : index
    %c0_7 = arith.constant 0 : index
    %9 = vector.load %arg3[%c0_6, %c0_7] : memref<256x256xbf16, #tpu.memory_space<vmem>>, vector<256x256xbf16>
    %cst_8 = arith.constant dense<0.000000e+00> : vector<1x256xf32>
    %10 = tpu.matmul %8, %9, %cst_8 {dimension_numbers = #tpu.dot_dimension_numbers<[1], [0], [0], [1], [0, 0, 1, 1], [], []>} : vector<1x256xbf16>, vector<256x256xbf16>, vector<1x256xf32> -> vector<1x256xf32>
    %c0_9 = arith.constant 0 : index
    %c0_10 = arith.constant 0 : index
    %11 = vector.load %arg4[%c0_9, %c0_10] : memref<1x256xf32, #tpu.memory_space<vmem>>, vector<1x256xf32>
    %12 = arith.addf %10, %11 : vector<1x256xf32>
    %cst_11 = arith.constant 0.000000e+00 : f32
    %13 = vector.broadcast %cst_11 : f32 to vector<1x256xf32>
    %14 = arith.maximumf %12, %13 : vector<1x256xf32>
    %15 = arith.truncf %14 : vector<1x256xf32> to vector<1x256xbf16>
    %c0_12 = arith.constant 0 : index
    %c0_13 = arith.constant 0 : index
    %16 = vector.load %arg5[%c0_12, %c0_13] : memref<256x256xbf16, #tpu.memory_space<vmem>>, vector<256x256xbf16>
    %cst_14 = arith.constant dense<0.000000e+00> : vector<1x256xf32>
    %17 = tpu.matmul %15, %16, %cst_14 {dimension_numbers = #tpu.dot_dimension_numbers<[1], [0], [0], [1], [0, 0, 1, 1], [], []>} : vector<1x256xbf16>, vector<256x256xbf16>, vector<1x256xf32> -> vector<1x256xf32>
    %c0_15 = arith.constant 0 : index
    %c0_16 = arith.constant 0 : index
    %18 = vector.load %arg6[%c0_15, %c0_16] : memref<1x256xf32, #tpu.memory_space<vmem>>, vector<1x256xf32>
    %19 = arith.addf %17, %18 : vector<1x256xf32>
    %cst_17 = arith.constant 0.000000e+00 : f32
    %20 = vector.broadcast %cst_17 : f32 to vector<1x256xf32>
    %21 = arith.maximumf %19, %20 : vector<1x256xf32>
    %22 = arith.truncf %21 : vector<1x256xf32> to vector<1x256xbf16>
    %c0_18 = arith.constant 0 : index
    %c0_19 = arith.constant 0 : index
    %23 = vector.load %arg7[%c0_18, %c0_19] : memref<256x256xbf16, #tpu.memory_space<vmem>>, vector<256x256xbf16>
    %cst_20 = arith.constant dense<0.000000e+00> : vector<1x256xf32>
    %24 = tpu.matmul %22, %23, %cst_20 {dimension_numbers = #tpu.dot_dimension_numbers<[1], [0], [0], [1], [0, 0, 1, 1], [], []>} : vector<1x256xbf16>, vector<256x256xbf16>, vector<1x256xf32> -> vector<1x256xf32>
    %c0_21 = arith.constant 0 : index
    %c0_22 = arith.constant 0 : index
    %25 = vector.load %arg8[%c0_21, %c0_22] : memref<1x256xf32, #tpu.memory_space<vmem>>, vector<1x256xf32>
    %26 = arith.addf %24, %25 : vector<1x256xf32>
    %cst_23 = arith.constant 0.000000e+00 : f32
    %27 = vector.broadcast %cst_23 : f32 to vector<1x256xf32>
    %28 = arith.maximumf %26, %27 : vector<1x256xf32>
    %29 = arith.truncf %28 : vector<1x256xf32> to vector<1x256xbf16>
    %c0_24 = arith.constant 0 : index
    %c0_25 = arith.constant 0 : index
    %30 = vector.load %arg9[%c0_24, %c0_25] : memref<256x36xbf16, #tpu.memory_space<vmem>>, vector<256x36xbf16>
    %cst_26 = arith.constant dense<0.000000e+00> : vector<1x36xf32>
    %31 = tpu.matmul %29, %30, %cst_26 {dimension_numbers = #tpu.dot_dimension_numbers<[1], [0], [0], [1], [0, 0, 1, 1], [], []>} : vector<1x256xbf16>, vector<256x36xbf16>, vector<1x36xf32> -> vector<1x36xf32>
    %c0_27 = arith.constant 0 : index
    %c0_28 = arith.constant 0 : index
    %32 = vector.load %arg10[%c0_27, %c0_28] : memref<1x36xf32, #tpu.memory_space<vmem>>, vector<1x36xf32>
    %33 = arith.addf %31, %32 : vector<1x36xf32>
    %34 = vector.extract_strided_slice %33 {offsets = [0, 0], sizes = [1, 4], strides = [1, 1]} : vector<1x36xf32> to vector<1x4xf32>
    %c0_29 = arith.constant 0 : index
    %c0_30 = arith.constant 0 : index
    %35 = vector.load %arg15[%c0_29, %c0_30] : memref<8x4xf32, #tpu.memory_space<vmem>>, vector<1x4xf32>
    tpu.vector_store %arg15[%c0_29, %c0_30], %34 {strides = array<i32>} : memref<8x4xf32, #tpu.memory_space<vmem>>, vector<1x4xf32>,
    %36 = vector.extract_strided_slice %33 {offsets = [0, 4], sizes = [1, 4], strides = [1, 1]} : vector<1x36xf32> to vector<1x4xf32>
    %c1 = arith.constant 1 : index
    %c0_31 = arith.constant 0 : index
    %37 = vector.load %arg15[%c1, %c0_31] : memref<8x4xf32, #tpu.memory_space<vmem>>, vector<1x4xf32>
    tpu.vector_store %arg15[%c1, %c0_31], %36 {strides = array<i32>} : memref<8x4xf32, #tpu.memory_space<vmem>>, vector<1x4xf32>,
    %38 = vector.extract_strided_slice %33 {offsets = [0, 8], sizes = [1, 4], strides = [1, 1]} : vector<1x36xf32> to vector<1x4xf32>
    %c2 = arith.constant 2 : index
    %c0_32 = arith.constant 0 : index
    %39 = vector.load %arg15[%c2, %c0_32] : memref<8x4xf32, #tpu.memory_space<vmem>>, vector<1x4xf32>
    tpu.vector_store %arg15[%c2, %c0_32], %38 {strides = array<i32>} : memref<8x4xf32, #tpu.memory_space<vmem>>, vector<1x4xf32>,
    %40 = vector.extract_strided_slice %33 {offsets = [0, 12], sizes = [1, 4], strides = [1, 1]} : vector<1x36xf32> to vector<1x4xf32>
    %c3 = arith.constant 3 : index
    %c0_33 = arith.constant 0 : index
    %41 = vector.load %arg15[%c3, %c0_33] : memref<8x4xf32, #tpu.memory_space<vmem>>, vector<1x4xf32>
    tpu.vector_store %arg15[%c3, %c0_33], %40 {strides = array<i32>} : memref<8x4xf32, #tpu.memory_space<vmem>>, vector<1x4xf32>,
    %42 = vector.extract_strided_slice %33 {offsets = [0, 16], sizes = [1, 4], strides = [1, 1]} : vector<1x36xf32> to vector<1x4xf32>
    %c4 = arith.constant 4 : index
    %c0_34 = arith.constant 0 : index
    %43 = vector.load %arg15[%c4, %c0_34] : memref<8x4xf32, #tpu.memory_space<vmem>>, vector<1x4xf32>
    tpu.vector_store %arg15[%c4, %c0_34], %42 {strides = array<i32>} : memref<8x4xf32, #tpu.memory_space<vmem>>, vector<1x4xf32>,
    %44 = vector.extract_strided_slice %33 {offsets = [0, 20], sizes = [1, 4], strides = [1, 1]} : vector<1x36xf32> to vector<1x4xf32>
    %c5 = arith.constant 5 : index
    %c0_35 = arith.constant 0 : index
    %45 = vector.load %arg15[%c5, %c0_35] : memref<8x4xf32, #tpu.memory_space<vmem>>, vector<1x4xf32>
    tpu.vector_store %arg15[%c5, %c0_35], %44 {strides = array<i32>} : memref<8x4xf32, #tpu.memory_space<vmem>>, vector<1x4xf32>,
    %46 = vector.extract_strided_slice %33 {offsets = [0, 24], sizes = [1, 4], strides = [1, 1]} : vector<1x36xf32> to vector<1x4xf32>
    %c6 = arith.constant 6 : index
    %c0_36 = arith.constant 0 : index
    %47 = vector.load %arg15[%c6, %c0_36] : memref<8x4xf32, #tpu.memory_space<vmem>>, vector<1x4xf32>
    tpu.vector_store %arg15[%c6, %c0_36], %46 {strides = array<i32>} : memref<8x4xf32, #tpu.memory_space<vmem>>, vector<1x4xf32>,
    %48 = vector.extract_strided_slice %33 {offsets = [0, 28], sizes = [1, 4], strides = [1, 1]} : vector<1x36xf32> to vector<1x4xf32>
    %c7 = arith.constant 7 : index
    %c0_37 = arith.constant 0 : index
    %49 = vector.load %arg15[%c7, %c0_37] : memref<8x4xf32, #tpu.memory_space<vmem>>, vector<1x4xf32>
    tpu.vector_store %arg15[%c7, %c0_37], %48 {strides = array<i32>} : memref<8x4xf32, #tpu.memory_space<vmem>>, vector<1x4xf32>,
    %c0_38 = arith.constant 0 : index
    %c0_39 = arith.constant 0 : index
    %50 = vector.load %arg15[%c0_38, %c0_39] : memref<8x4xf32, #tpu.memory_space<vmem>>, vector<8x4xf32>
    %cst_40 = arith.constant dense<0xFF800000> : vector<8xf32>
    %51 = vector.multi_reduction <maximumf>, %50, %cst_40 [1] : vector<8x4xf32> to vector<8xf32>
    %52 = vector.shape_cast %51 : vector<8xf32> to vector<8x1xf32>
    %53 = vector.broadcast %52 : vector<8x1xf32> to vector<8x4xf32>
    %54 = arith.subf %50, %53 : vector<8x4xf32>
    %55 = math.exp %54 : vector<8x4xf32>
    %cst_41 = arith.constant dense<0.000000e+00> : vector<8xf32>
    %56 = vector.multi_reduction <add>, %55, %cst_41 [1] : vector<8x4xf32> to vector<8xf32>
    %57 = vector.shape_cast %56 : vector<8xf32> to vector<8x1xf32>
    %58 = vector.broadcast %57 : vector<8x1xf32> to vector<8x4xf32>
    %59 = arith.divf %55, %58 : vector<8x4xf32>
    %c0_42 = arith.constant 0 : index
    %c0_43 = arith.constant 0 : index
    %60 = vector.load %arg11[%c0_42, %c0_43] : memref<8x4xf32, #tpu.memory_space<vmem>>, vector<8x4xf32>
    tpu.vector_store %arg11[%c0_42, %c0_43], %59 {strides = array<i32>} : memref<8x4xf32, #tpu.memory_space<vmem>>, vector<8x4xf32>,
    %cst_44 = arith.constant 1.000000e+04 : f32
    %61 = vector.broadcast %cst_44 : f32 to vector<8x4xf32>
    %62 = arith.mulf %59, %61 : vector<8x4xf32>
    %cst_45 = arith.constant dense<0xFF800000> : vector<8xf32>
    %63 = vector.multi_reduction <maximumf>, %62, %cst_45 [1] : vector<8x4xf32> to vector<8xf32>
    %64 = vector.shape_cast %63 : vector<8xf32> to vector<8x1xf32>
    %65 = vector.broadcast %64 : vector<8x1xf32> to vector<8x4xf32>
    %66 = arith.subf %62, %65 : vector<8x4xf32>
    %67 = math.exp %66 : vector<8x4xf32>
    %cst_46 = arith.constant dense<0.000000e+00> : vector<8xf32>
    %68 = vector.multi_reduction <add>, %67, %cst_46 [1] : vector<8x4xf32> to vector<8xf32>
    %69 = vector.shape_cast %68 : vector<8xf32> to vector<8x1xf32>
    %70 = tpu.reciprocal %69 {approx = true} : vector<8x1xf32> -> vector<8x1xf32>
    %71 = vector.broadcast %70 : vector<8x1xf32> to vector<8x4xf32>
    %72 = arith.mulf %67, %71 : vector<8x4xf32>
    %c0_47 = arith.constant 0 : index
    %c0_48 = arith.constant 0 : index
    %73 = vector.load %arg12[%c0_47, %c0_48] : memref<8x4xf32, #tpu.memory_space<vmem>>, vector<8x4xf32>
    tpu.vector_store %arg12[%c0_47, %c0_48], %72 {strides = array<i32>} : memref<8x4xf32, #tpu.memory_space<vmem>>, vector<8x4xf32>,
    %cst_49 = arith.constant dense<0xFF800000> : vector<8xf32>
    %74 = vector.multi_reduction <maximumf>, %59, %cst_49 [1] : vector<8x4xf32> to vector<8xf32>
    %75 = vector.shape_cast %74 : vector<8xf32> to vector<8x1xf32>
    %76 = vector.broadcast %75 : vector<8x1xf32> to vector<8x4xf32>
    %77 = arith.subf %59, %76 : vector<8x4xf32>
    %78 = math.exp %77 : vector<8x4xf32>
    %cst_50 = arith.constant dense<0.000000e+00> : vector<8xf32>
    %79 = vector.multi_reduction <add>, %78, %cst_50 [1] : vector<8x4xf32> to vector<8xf32>
    %80 = vector.shape_cast %79 : vector<8xf32> to vector<8x1xf32>
    %81 = tpu.reciprocal %80 {approx = true} : vector<8x1xf32> -> vector<8x1xf32>
    %82 = vector.broadcast %81 : vector<8x1xf32> to vector<8x4xf32>
    %83 = arith.mulf %78, %82 : vector<8x4xf32>
    %c0_51 = arith.constant 0 : index
    %c0_52 = arith.constant 0 : index
    %84 = vector.load %arg13[%c0_51, %c0_52] : memref<8x4xf32, #tpu.memory_space<vmem>>, vector<8x4xf32>
    tpu.vector_store %arg13[%c0_51, %c0_52], %83 {strides = array<i32>} : memref<8x4xf32, #tpu.memory_space<vmem>>, vector<8x4xf32>,
    %85 = vector.extract_strided_slice %33 {offsets = [0, 32], sizes = [1, 4], strides = [1, 1]} : vector<1x36xf32> to vector<1x4xf32>
    %cst_53 = arith.constant 0.000000e+00 : f32
    %86 = vector.broadcast %cst_53 : f32 to vector<1x4xf32>
    %87 = arith.subf %86, %85 : vector<1x4xf32>
    %88 = math.exp %87 : vector<1x4xf32>
    %cst_54 = arith.constant 1.000000e+00 : f32
    %89 = vector.broadcast %cst_54 : f32 to vector<1x4xf32>
    %90 = arith.addf %89, %88 : vector<1x4xf32>
    %91 = tpu.reciprocal %90 {approx = true} : vector<1x4xf32> -> vector<1x4xf32>
    %c0_55 = arith.constant 0 : index
    %c0_56 = arith.constant 0 : index
    %92 = vector.load %arg14[%c0_55, %c0_56] : memref<1x4xf32, #tpu.memory_space<vmem>>, vector<1x4xf32>
    tpu.vector_store %arg14[%c0_55, %c0_56], %91 {strides = array<i32>} : memref<1x4xf32, #tpu.memory_space<vmem>>, vector<1x4xf32>,
    return
  }
}

</mosaic_0001>

<llo_original>
// kernel: tpu_custom_call.1
$region0: #{tpu_custom_call.1}
  #allocation0 [shape = 'u32[]', space=smem, size = 0x4, offset = 0x4, fixed_abs, tag = 'smem constant byte address 0x4 - core index']
  #allocation1 [shape = 'u32[72,128]{1,0:T(1,128)}', space=vmem, size = 0x9000, scoped, tag = 'internal scratch']
  #allocation2 [shape = 'f32[8,4]{1,0:T(8,128)}', space=vmem, size = 0x1000, scoped, tag = 'scratch operand']
  %s0 = inlined_call_operand.vmem [shape: f32[1,36], index: 0, kind: input, shape index: {}]
  %s1 = inlined_call_operand.vmem [shape: bf16[36,256], index: 1, kind: input, shape index: {}]
  %s2 = inlined_call_operand.vmem [shape: f32[1,256], index: 2, kind: input, shape index: {}]
  %s3 = inlined_call_operand.hbm [shape: bf16[256,256], index: 3, kind: input, shape index: {}]
  %s4 = inlined_call_operand.vmem [shape: f32[1,256], index: 4, kind: input, shape index: {}]
  %s5 = inlined_call_operand.hbm [shape: bf16[256,256], index: 5, kind: input, shape index: {}]
  %s6 = inlined_call_operand.vmem [shape: f32[1,256], index: 6, kind: input, shape index: {}]
  %s7 = inlined_call_operand.hbm [shape: bf16[256,256], index: 7, kind: input, shape index: {}]
  %s8 = inlined_call_operand.vmem [shape: f32[1,256], index: 8, kind: input, shape index: {}]
  %s9 = inlined_call_operand.vmem [shape: bf16[256,36], index: 9, kind: input, shape index: {}]
  %s10 = inlined_call_operand.vmem [shape: f32[1,36], index: 10, kind: input, shape index: {}]
  %s11 = inlined_call_operand.vmem [shape: f32[8,4], index: 11, kind: output, shape index: {0}]
  %s12 = inlined_call_operand.vmem [shape: f32[8,4], index: 12, kind: output, shape index: {1}]
  %s13 = inlined_call_operand.vmem [shape: f32[8,4], index: 13, kind: output, shape index: {2}]
  %s14 = inlined_call_operand.hbm [shape: f32[1,4], index: 14, kind: output, shape index: {3}]
  %15 = xla_tuple %s11, %s12, %s13, %s14
  %s16 = sld [smem:[#allocation0]]
  $region90: #{tpu_custom_call.1} parent=0
    _
  %s18 = ssub.s32 1, %s16
  %s19 = scalar_select 0, %s18, %s16
  $region1: #{tpu_custom_call.1} parent=0
    #allocation3 [shape = 'u8[131072]{0}', space=vmem, size = 0x20000, scoped, tag = 'input window, operand 3, single buffered']
    #allocation4 [shape = 's32[1]{0}', space=sflag, size = 0x4, scoped, tag = 'scoped memory for tpu_custom_call.1']
    #allocation5 [shape = 's32[1]{0}', space=sflag, size = 0x4, scoped, tag = 'scoped memory for tpu_custom_call.1']
    #allocation6 [shape = 'u8[131072]{0}', space=vmem, size = 0x20000, scoped, tag = 'input window, operand 5, single buffered']
    #allocation7 [shape = 's32[1]{0}', space=sflag, size = 0x4, scoped, tag = 'scoped memory for tpu_custom_call.1']
    #allocation8 [shape = 'u8[131072]{0}', space=vmem, size = 0x20000, scoped, tag = 'input window, operand 7, single buffered']
    #allocation9 [shape = 'u8[512]{0}', space=vmem, size = 0x400, scoped, tag = 'output window, operand 3, single buffered']
    %20 = vsyncpa [#allocation4], 0
    %21 = vsyncpa [#allocation7], 0
    %22 = vsyncpa [#allocation5], 0
    // Predicated region
    $region2: #{tpu_custom_call.1} parent=1 // pred_check
      _
    $region3: #{tpu_custom_call.1} parent=1 // pred_check_branch
      %24 = sbr.rel (0) target = $region5
    $region4: #{tpu_custom_call.1} parent=1 // pred_region
      _
    $region5: #{tpu_custom_call.1} parent=1 // pred_fallthru
      _
    // Predicated region
    $region6: #{tpu_custom_call.1} parent=1 // pred_check
      _
    $region7: #{tpu_custom_call.1} parent=1 // pred_check_branch
      %26 = sbr.rel (0) target = $region9
    $region8: #{tpu_custom_call.1} parent=1 // pred_region
      _
    $region9: #{tpu_custom_call.1} parent=1 // pred_fallthru
      _
    // Predicated region
    $region10: #{tpu_custom_call.1} parent=1 // pred_check
      _
    $region11: #{tpu_custom_call.1} parent=1 // pred_check_branch
      %28 = sbr.rel (0) target = $region13
    $region12: #{tpu_custom_call.1} parent=1 // pred_region
      _
    $region13: #{tpu_custom_call.1} parent=1 // pred_fallthru
      _
    // Predicated region
    $region14: #{tpu_custom_call.1} parent=1 // pred_check
      _
    $region15: #{tpu_custom_call.1} parent=1 // pred_check_branch
      %30 = sbr.rel (0) target = $region17
    $region16: #{tpu_custom_call.1} parent=1 // pred_region
      %32 = vsyncadd [#allocation4], 0
      %s33 = sshll.u32 %s3, 4
      %s34 = int_to_ptr.hbm [resolvable:$true] %s33
      %s35 = sshll.u32 [#allocation3], 4
      %s36 = int_to_ptr.vmem [resolvable:$true] %s35
      %41 = dma.hbm_to_vmem [thread:$0]  %s34, 4096, %s36, [#allocation4], 128, 128, 8
    $region17: #{tpu_custom_call.1} parent=1 // pred_fallthru
      _
    // Predicated region
    $region18: #{tpu_custom_call.1} parent=1 // pred_check
      _
    $region19: #{tpu_custom_call.1} parent=1 // pred_check_branch
      %43 = sbr.rel (0) target = $region21
    $region20: #{tpu_custom_call.1} parent=1 // pred_region
      _
    $region21: #{tpu_custom_call.1} parent=1 // pred_fallthru
      _
    // Predicated region
    $region22: #{tpu_custom_call.1} parent=1 // pred_check
      _
    $region23: #{tpu_custom_call.1} parent=1 // pred_check_branch
      %45 = sbr.rel (0) target = $region25
    $region24: #{tpu_custom_call.1} parent=1 // pred_region
      %47 = vsyncadd [#allocation7], 0
      %s48 = sshll.u32 %s5, 4
      %s49 = int_to_ptr.hbm [resolvable:$true] %s48
      %s50 = sshll.u32 [#allocation6], 4
      %s51 = int_to_ptr.vmem [resolvable:$true] %s50
      %56 = dma.hbm_to_vmem [thread:$0]  %s49, 4096, %s51, [#allocation7], 128, 128, 8
    $region25: #{tpu_custom_call.1} parent=1 // pred_fallthru
      _
    // Predicated region
    $region26: #{tpu_custom_call.1} parent=1 // pred_check
      _
    $region27: #{tpu_custom_call.1} parent=1 // pred_check_branch
      %58 = sbr.rel (0) target = $region29
    $region28: #{tpu_custom_call.1} parent=1 // pred_region
      _
    $region29: #{tpu_custom_call.1} parent=1 // pred_fallthru
      _
    // Predicated region
    $region30: #{tpu_custom_call.1} parent=1 // pred_check
      _
    $region31: #{tpu_custom_call.1} parent=1 // pred_check_branch
      %60 = sbr.rel (0) target = $region33
    $region32: #{tpu_custom_call.1} parent=1 // pred_region
      %62 = vsyncadd [#allocation7], 0
      %s63 = sshll.u32 %s7, 4
      %s64 = int_to_ptr.hbm [resolvable:$true] %s63
      %s65 = sshll.u32 [#allocation8], 4
      %s66 = int_to_ptr.vmem [resolvable:$true] %s65
      %71 = dma.hbm_to_vmem [thread:$0]  %s64, 4096, %s66, [#allocation7], 128, 128, 8
    $region33: #{tpu_custom_call.1} parent=1 // pred_fallthru
      _
    // Predicated region
    $region34: #{tpu_custom_call.1} parent=1 // pred_check
      _
    $region35: #{tpu_custom_call.1} parent=1 // pred_check_branch
      %73 = sbr.rel (0) target = $region37
    $region36: #{tpu_custom_call.1} parent=1 // pred_region
      _
    $region37: #{tpu_custom_call.1} parent=1 // pred_fallthru
      _
    // Predicated region
    $region38: #{tpu_custom_call.1} parent=1 // pred_check
      _
    $region39: #{tpu_custom_call.1} parent=1 // pred_check_branch
      %75 = sbr.rel (0) target = $region41
    $region40: #{tpu_custom_call.1} parent=1 // pred_region
      _
    $region41: #{tpu_custom_call.1} parent=1 // pred_fallthru
      _
    // Predicated region
    $region42: #{tpu_custom_call.1} parent=1 // pred_check
      _
    $region43: #{tpu_custom_call.1} parent=1 // pred_check_branch
      %77 = sbr.rel (0) target = $region45
    $region44: #{tpu_custom_call.1} parent=1 // pred_region
      _
    $region45: #{tpu_custom_call.1} parent=1 // pred_fallthru
      _
    // Predicated region
    $region46: #{tpu_custom_call.1} parent=1 // pred_check
      _
    $region47: #{tpu_custom_call.1} parent=1 // pred_check_branch
      %79 = sbr.rel (0) target = $region49
    $region48: #{tpu_custom_call.1} parent=1 // pred_region
      %81 = dma.done [#allocation4], 4096
    $region49: #{tpu_custom_call.1} parent=1 // pred_fallthru
      _
    // Predicated region
    $region50: #{tpu_custom_call.1} parent=1 // pred_check
      _
    $region51: #{tpu_custom_call.1} parent=1 // pred_check_branch
      %83 = sbr.rel (0) target = $region53
    $region52: #{tpu_custom_call.1} parent=1 // pred_region
      %85 = dma.done [#allocation7], 4096
    $region53: #{tpu_custom_call.1} parent=1 // pred_fallthru
      _
    // Predicated region
    $region54: #{tpu_custom_call.1} parent=1 // pred_check
      _
    $region55: #{tpu_custom_call.1} parent=1 // pred_check_branch
      %87 = sbr.rel (0) target = $region57
    $region56: #{tpu_custom_call.1} parent=1 // pred_region
      %89 = dma.done [#allocation7], 4096
    $region57: #{tpu_custom_call.1} parent=1 // pred_fallthru
      _
    %v91 = vld [vmem:[%s0] sm:$0x1]
    %v92 = vpack.c.bf16 %v91, %v91
    %v93 = vld [vmem:[%s1] sm:$0xff]
    %v94 = vld [vmem:[%s1 + $0x8] sm:$0xff]
    %v95 = vld [vmem:[%s1 + $0x10] sm:$0xff]
    %v96 = vld [vmem:[%s1 + $0x18] sm:$0xff]
    %v97 = vld [vmem:[%s1 + $0x20] sm:$0x33]
    %v98 = vld [vmem:[%s2] sm:$0x3]
    %v104 = vunpack.c.l.b16 %v93
    %v105 = vunpack.c.h.b16 %v93
    %v106 = vunpack.c.l.b16 %v94
    %v107 = vunpack.c.h.b16 %v94
    %v108 = vunpack.c.l.b16 %v95
    %v109 = vunpack.c.h.b16 %v95
    %v110 = vunpack.c.l.b16 %v96
    %v111 = vunpack.c.h.b16 %v96
    %v112 = vunpack.c.l.b16 %v97
    %v113 = vunpack.c.h.b16 %v97
    %v114 = vpack.c.b16 %v106, %v104
    %v115 = vpack.c.b16 %v107, %v105
    %v116 = vpack.c.b16 %v110, %v108
    %v117 = vpack.c.b16 %v111, %v109
    %v118 = vpack.c.b16 %v112, %v112
    %v119 = vpack.c.b16 %v113, %v113
    %v125 = vperm.slane %v98, 0
    %v126 = vperm.slane %v98, 1
    %vm129 = vcmask 293888
    %v131 = vsel %vm129, %v92, 0
    %vm133 = vcmask 1041408
    %v135 = vsel %vm133, %v118, 0
    %v138 = vsel %vm133, %v119, 0
    %140 = vmatpush.bf16.msra.mxu0 0
    %141 = vmatpush.bf16.msra.mxu0 0
    %142 = vmatpush.bf16.msra.mxu0 0
    %143 = vmatpush.bf16.msra.mxu0 0
    %144 = vmatpush.bf16.msra.mxu0 0
    %145 = vmatpush.bf16.msra.mxu0 %v135
    %146 = vmatpush.bf16.msra.mxu0 %v116
    %147 = vmatpush.bf16.msra.mxu0 %v114
    %148 = vmatmul.bf16.gmra.mxu0 %v131
    %v149 = vpop.f32.mrf.mxu0
    %v150 = vadd.f32 %v125, %v149
    %v151 = vpop.f32.mrf.mxu0
    %152 = vdwg.mxu0
    %153 = vmatpush.bf16.msra.mxu0 0
    %154 = vmatpush.bf16.msra.mxu0 0
    %155 = vmatpush.bf16.msra.mxu0 0
    %156 = vmatpush.bf16.msra.mxu0 0
    %157 = vmatpush.bf16.msra.mxu0 0
    %158 = vmatpush.bf16.msra.mxu0 %v138
    %159 = vmatpush.bf16.msra.mxu0 %v117
    %160 = vmatpush.bf16.msra.mxu0 %v115
    %161 = vmatmul.bf16.gmra.mxu0 %v131
    %v162 = vpop.f32.mrf.mxu0
    %v163 = vadd.f32 %v126, %v162
    %v164 = vpop.f32.mrf.mxu0
    %165 = vdwg.mxu0
    %v166 = vmax.f32 %v150, 0.0
    %v167 = vmax.f32 %v163, 0.0
    %v168 = vpack.c.bf16 %v166, %v166
    %v169 = vpack.c.bf16 %v167, %v167
    %v170 = vld [vmem:[#allocation3] sm:$0xff]
    %v171 = vld [vmem:[#allocation3 + $0x8] sm:$0xff]
    %v172 = vld [vmem:[#allocation3 + $0x10] sm:$0xff]
    %v173 = vld [vmem:[#allocation3 + $0x18] sm:$0xff]
    %v174 = vld [vmem:[#allocation3 + $0x20] sm:$0xff]
    %v175 = vld [vmem:[#allocation3 + $0x28] sm:$0xff]
    %v176 = vld [vmem:[#allocation3 + $0x30] sm:$0xff]
    %v177 = vld [vmem:[#allocation3 + $0x38] sm:$0xff]
    %v178 = vld [vmem:[#allocation3 + $0x40] sm:$0xff]
    %v179 = vld [vmem:[#allocation3 + $0x48] sm:$0xff]
    %v180 = vld [vmem:[#allocation3 + $0x50] sm:$0xff]
    %v181 = vld [vmem:[#allocation3 + $0x58] sm:$0xff]
    %v182 = vld [vmem:[#allocation3 + $0x60] sm:$0xff]
    %v183 = vld [vmem:[#allocation3 + $0x68] sm:$0xff]
    %v184 = vld [vmem:[#allocation3 + $0x70] sm:$0xff]
    %v185 = vld [vmem:[#allocation3 + $0x78] sm:$0xff]
    %v186 = vld [vmem:[#allocation3 + $0x80] sm:$0xff]
    %v187 = vld [vmem:[#allocation3 + $0x88] sm:$0xff]
    %v188 = vld [vmem:[#allocation3 + $0x90] sm:$0xff]
    %v189 = vld [vmem:[#allocation3 + $0x98] sm:$0xff]
    %v190 = vld [vmem:[#allocation3 + $0xa0] sm:$0xff]
    %v191 = vld [vmem:[#allocation3 + $0xa8] sm:$0xff]
    %v192 = vld [vmem:[#allocation3 + $0xb0] sm:$0xff]
    %v193 = vld [vmem:[#allocation3 + $0xb8] sm:$0xff]
    %v194 = vld [vmem:[#allocation3 + $0xc0] sm:$0xff]
    %v195 = vld [vmem:[#allocation3 + $0xc8] sm:$0xff]
    %v196 = vld [vmem:[#allocation3 + $0xd0] sm:$0xff]
    %v197 = vld [vmem:[#allocation3 + $0xd8] sm:$0xff]
    %v198 = vld [vmem:[#allocation3 + $0xe0] sm:$0xff]
    %v199 = vld [vmem:[#allocation3 + $0xe8] sm:$0xff]
    %v200 = vld [vmem:[#allocation3 + $0xf0] sm:$0xff]
    %v201 = vld [vmem:[#allocation3 + $0xf8] sm:$0xff]
    %v202 = vld [vmem:[%s4] sm:$0x3]
    %v235 = vunpack.c.l.b16 %v170
    %v236 = vunpack.c.h.b16 %v170
    %v237 = vunpack.c.l.b16 %v171
    %v238 = vunpack.c.h.b16 %v171
    %v239 = vunpack.c.l.b16 %v172
    %v240 = vunpack.c.h.b16 %v172
    %v241 = vunpack.c.l.b16 %v173
    %v242 = vunpack.c.h.b16 %v173
    %v243 = vunpack.c.l.b16 %v174
    %v244 = vunpack.c.h.b16 %v174
    %v245 = vunpack.c.l.b16 %v175
    %v246 = vunpack.c.h.b16 %v175
    %v247 = vunpack.c.l.b16 %v176
    %v248 = vunpack.c.h.b16 %v176
    %v249 = vunpack.c.l.b16 %v177
    %v250 = vunpack.c.h.b16 %v177
    %v251 = vunpack.c.l.b16 %v178
    %v252 = vunpack.c.h.b16 %v178
    %v253 = vunpack.c.l.b16 %v179
    %v254 = vunpack.c.h.b16 %v179
    %v255 = vunpack.c.l.b16 %v180
    %v256 = vunpack.c.h.b16 %v180
    %v257 = vunpack.c.l.b16 %v181
    %v258 = vunpack.c.h.b16 %v181
    %v259 = vunpack.c.l.b16 %v182
    %v260 = vunpack.c.h.b16 %v182
    %v261 = vunpack.c.l.b16 %v183
    %v262 = vunpack.c.h.b16 %v183
    %v263 = vunpack.c.l.b16 %v184
    %v264 = vunpack.c.h.b16 %v184
    %v265 = vunpack.c.l.b16 %v185
    %v266 = vunpack.c.h.b16 %v185
    %v267 = vunpack.c.l.b16 %v186
    %v268 = vunpack.c.h.b16 %v186
    %v269 = vunpack.c.l.b16 %v187
    %v270 = vunpack.c.h.b16 %v187
    %v271 = vunpack.c.l.b16 %v188
    %v272 = vunpack.c.h.b16 %v188
    %v273 = vunpack.c.l.b16 %v189
    %v274 = vunpack.c.h.b16 %v189
    %v275 = vunpack.c.l.b16 %v190
    %v276 = vunpack.c.h.b16 %v190
    %v277 = vunpack.c.l.b16 %v191
    %v278 = vunpack.c.h.b16 %v191
    %v279 = vunpack.c.l.b16 %v192
    %v280 = vunpack.c.h.b16 %v192
    %v281 = vunpack.c.l.b16 %v193
    %v282 = vunpack.c.h.b16 %v193
    %v283 = vunpack.c.l.b16 %v194
    %v284 = vunpack.c.h.b16 %v194
    %v285 = vunpack.c.l.b16 %v195
    %v286 = vunpack.c.h.b16 %v195
    %v287 = vunpack.c.l.b16 %v196
    %v288 = vunpack.c.h.b16 %v196
    %v289 = vunpack.c.l.b16 %v197
    %v290 = vunpack.c.h.b16 %v197
    %v291 = vunpack.c.l.b16 %v198
    %v292 = vunpack.c.h.b16 %v198
    %v293 = vunpack.c.l.b16 %v199
    %v294 = vunpack.c.h.b16 %v199
    %v295 = vunpack.c.l.b16 %v200
    %v296 = vunpack.c.h.b16 %v200
    %v297 = vunpack.c.l.b16 %v201
    %v298 = vunpack.c.h.b16 %v201
    %v299 = vpack.c.b16 %v237, %v235
    %v300 = vpack.c.b16 %v238, %v236
    %v301 = vpack.c.b16 %v241, %v239
    %v302 = vpack.c.b16 %v242, %v240
    %v303 = vpack.c.b16 %v245, %v243
    %v304 = vpack.c.b16 %v246, %v244
    %v305 = vpack.c.b16 %v249, %v247
    %v306 = vpack.c.b16 %v250, %v248
    %v307 = vpack.c.b16 %v253, %v251
    %v308 = vpack.c.b16 %v254, %v252
    %v309 = vpack.c.b16 %v257, %v255
    %v310 = vpack.c.b16 %v258, %v256
    %v311 = vpack.c.b16 %v261, %v259
    %v312 = vpack.c.b16 %v262, %v260
    %v313 = vpack.c.b16 %v265, %v263
    %v314 = vpack.c.b16 %v266, %v264
    %v315 = vpack.c.b16 %v269, %v267
    %v316 = vpack.c.b16 %v270, %v268
    %v317 = vpack.c.b16 %v273, %v271
    %v318 = vpack.c.b16 %v274, %v272
    %v319 = vpack.c.b16 %v277, %v275
    %v320 = vpack.c.b16 %v278, %v276
    %v321 = vpack.c.b16 %v281, %v279
    %v322 = vpack.c.b16 %v282, %v280
    %v323 = vpack.c.b16 %v285, %v283
    %v324 = vpack.c.b16 %v286, %v284
    %v325 = vpack.c.b16 %v289, %v287
    %v326 = vpack.c.b16 %v290, %v288
    %v327 = vpack.c.b16 %v293, %v291
    %v328 = vpack.c.b16 %v294, %v292
    %v329 = vpack.c.b16 %v297, %v295
    %v330 = vpack.c.b16 %v298, %v296
    %v364 = vperm.slane %v202, 0
    %v365 = vperm.slane %v202, 1
    %368 = vmatpush.bf16.msra.mxu0 %v313
    %369 = vmatpush.bf16.msra.mxu0 %v311
    %370 = vmatpush.bf16.msra.mxu0 %v309
    %371 = vmatpush.bf16.msra.mxu0 %v307
    %372 = vmatpush.bf16.msra.mxu0 %v305
    %373 = vmatpush.bf16.msra.mxu0 %v303
    %374 = vmatpush.bf16.msra.mxu0 %v301
    %375 = vmatpush.bf16.msra.mxu0 %v299
    %376 = vmatmul.bf16.gmra.mxu0 %v168
    %v377 = vpop.f32.mrf.mxu0
    %v378 = vadd.f32 %v364, %v377
    %v379 = vpop.f32.mrf.mxu0
    %380 = vdwg.mxu0
    %381 = vmatpush.bf16.msra.mxu0 %v329
    %382 = vmatpush.bf16.msra.mxu0 %v327
    %383 = vmatpush.bf16.msra.mxu0 %v325
    %384 = vmatpush.bf16.msra.mxu0 %v323
    %385 = vmatpush.bf16.msra.mxu0 %v321
    %386 = vmatpush.bf16.msra.mxu0 %v319
    %387 = vmatpush.bf16.msra.mxu0 %v317
    %388 = vmatpush.bf16.msra.mxu0 %v315
    %389 = vmatmul.bf16.gmra.mxu0 %v169
    %v390 = vpop.f32.mrf.mxu0
    %v391 = vadd.f32 %v378, %v390
    %v392 = vpop.f32.mrf.mxu0
    %393 = vdwg.mxu0
    %394 = vmatpush.bf16.msra.mxu0 %v314
    %395 = vmatpush.bf16.msra.mxu0 %v312
    %396 = vmatpush.bf16.msra.mxu0 %v310
    %397 = vmatpush.bf16.msra.mxu0 %v308
    %398 = vmatpush.bf16.msra.mxu0 %v306
    %399 = vmatpush.bf16.msra.mxu0 %v304
    %400 = vmatpush.bf16.msra.mxu0 %v302
    %401 = vmatpush.bf16.msra.mxu0 %v300
    %402 = vmatmul.bf16.gmra.mxu0 %v168
    %v403 = vpop.f32.mrf.mxu0
    %v404 = vadd.f32 %v365, %v403
    %v405 = vpop.f32.mrf.mxu0
    %406 = vdwg.mxu0
    %407 = vmatpush.bf16.msra.mxu0 %v330
    %408 = vmatpush.bf16.msra.mxu0 %v328
    %409 = vmatpush.bf16.msra.mxu0 %v326
    %410 = vmatpush.bf16.msra.mxu0 %v324
    %411 = vmatpush.bf16.msra.mxu0 %v322
    %412 = vmatpush.bf16.msra.mxu0 %v320
    %413 = vmatpush.bf16.msra.mxu0 %v318
    %414 = vmatpush.bf16.msra.mxu0 %v316
    %415 = vmatmul.bf16.gmra.mxu0 %v169
    %v416 = vpop.f32.mrf.mxu0
    %v417 = vadd.f32 %v404, %v416
    %v418 = vpop.f32.mrf.mxu0
    %419 = vdwg.mxu0
    %v420 = vmax.f32 %v391, 0.0
    %v421 = vmax.f32 %v417, 0.0
    %v422 = vpack.c.bf16 %v420, %v420
    %v423 = vpack.c.bf16 %v421, %v421
    %v424 = vld [vmem:[#allocation6] sm:$0xff]
    %v425 = vld [vmem:[#allocation6 + $0x8] sm:$0xff]
    %v426 = vld [vmem:[#allocation6 + $0x10] sm:$0xff]
    %v427 = vld [vmem:[#allocation6 + $0x18] sm:$0xff]
    %v428 = vld [vmem:[#allocation6 + $0x20] sm:$0xff]
    %v429 = vld [vmem:[#allocation6 + $0x28] sm:$0xff]
    %v430 = vld [vmem:[#allocation6 + $0x30] sm:$0xff]
    %v431 = vld [vmem:[#allocation6 + $0x38] sm:$0xff]
    %v432 = vld [vmem:[#allocation6 + $0x40] sm:$0xff]
    %v433 = vld [vmem:[#allocation6 + $0x48] sm:$0xff]
    %v434 = vld [vmem:[#allocation6 + $0x50] sm:$0xff]
    %v435 = vld [vmem:[#allocation6 + $0x58] sm:$0xff]
    %v436 = vld [vmem:[#allocation6 + $0x60] sm:$0xff]
    %v437 = vld [vmem:[#allocation6 + $0x68] sm:$0xff]
    %v438 = vld [vmem:[#allocation6 + $0x70] sm:$0xff]
    %v439 = vld [vmem:[#allocation6 + $0x78] sm:$0xff]
    %v440 = vld [vmem:[#allocation6 + $0x80] sm:$0xff]
    %v441 = vld [vmem:[#allocation6 + $0x88] sm:$0xff]
    %v442 = vld [vmem:[#allocation6 + $0x90] sm:$0xff]
    %v443 = vld [vmem:[#allocation6 + $0x98] sm:$0xff]
    %v444 = vld [vmem:[#allocation6 + $0xa0] sm:$0xff]
    %v445 = vld [vmem:[#allocation6 + $0xa8] sm:$0xff]
    %v446 = vld [vmem:[#allocation6 + $0xb0] sm:$0xff]
    %v447 = vld [vmem:[#allocation6 + $0xb8] sm:$0xff]
    %v448 = vld [vmem:[#allocation6 + $0xc0] sm:$0xff]
    %v449 = vld [vmem:[#allocation6 + $0xc8] sm:$0xff]
    %v450 = vld [vmem:[#allocation6 + $0xd0] sm:$0xff]
    %v451 = vld [vmem:[#allocation6 + $0xd8] sm:$0xff]
    %v452 = vld [vmem:[#allocation6 + $0xe0] sm:$0xff]
    %v453 = vld [vmem:[#allocation6 + $0xe8] sm:$0xff]
    %v454 = vld [vmem:[#allocation6 + $0xf0] sm:$0xff]
    %v455 = vld [vmem:[#allocation6 + $0xf8] sm:$0xff]
    %v456 = vld [vmem:[%s6] sm:$0x3]
    %v489 = vunpack.c.l.b16 %v424
    %v490 = vunpack.c.h.b16 %v424
    %v491 = vunpack.c.l.b16 %v425
    %v492 = vunpack.c.h.b16 %v425
    %v493 = vunpack.c.l.b16 %v426
    %v494 = vunpack.c.h.b16 %v426
    %v495 = vunpack.c.l.b16 %v427
    %v496 = vunpack.c.h.b16 %v427
    %v497 = vunpack.c.l.b16 %v428
    %v498 = vunpack.c.h.b16 %v428
    %v499 = vunpack.c.l.b16 %v429
    %v500 = vunpack.c.h.b16 %v429
    %v501 = vunpack.c.l.b16 %v430
    %v502 = vunpack.c.h.b16 %v430
    %v503 = vunpack.c.l.b16 %v431
    %v504 = vunpack.c.h.b16 %v431
    %v505 = vunpack.c.l.b16 %v432
    %v506 = vunpack.c.h.b16 %v432
    %v507 = vunpack.c.l.b16 %v433
    %v508 = vunpack.c.h.b16 %v433
    %v509 = vunpack.c.l.b16 %v434
    %v510 = vunpack.c.h.b16 %v434
    %v511 = vunpack.c.l.b16 %v435
    %v512 = vunpack.c.h.b16 %v435
    %v513 = vunpack.c.l.b16 %v436
    %v514 = vunpack.c.h.b16 %v436
    %v515 = vunpack.c.l.b16 %v437
    %v516 = vunpack.c.h.b16 %v437
    %v517 = vunpack.c.l.b16 %v438
    %v518 = vunpack.c.h.b16 %v438
    %v519 = vunpack.c.l.b16 %v439
    %v520 = vunpack.c.h.b16 %v439
    %v521 = vunpack.c.l.b16 %v440
    %v522 = vunpack.c.h.b16 %v440
    %v523 = vunpack.c.l.b16 %v441
    %v524 = vunpack.c.h.b16 %v441
    %v525 = vunpack.c.l.b16 %v442
    %v526 = vunpack.c.h.b16 %v442
    %v527 = vunpack.c.l.b16 %v443
    %v528 = vunpack.c.h.b16 %v443
    %v529 = vunpack.c.l.b16 %v444
    %v530 = vunpack.c.h.b16 %v444
    %v531 = vunpack.c.l.b16 %v445
    %v532 = vunpack.c.h.b16 %v445
    %v533 = vunpack.c.l.b16 %v446
    %v534 = vunpack.c.h.b16 %v446
    %v535 = vunpack.c.l.b16 %v447
    %v536 = vunpack.c.h.b16 %v447
    %v537 = vunpack.c.l.b16 %v448
    %v538 = vunpack.c.h.b16 %v448
    %v539 = vunpack.c.l.b16 %v449
    %v540 = vunpack.c.h.b16 %v449
    %v541 = vunpack.c.l.b16 %v450
    %v542 = vunpack.c.h.b16 %v450
    %v543 = vunpack.c.l.b16 %v451
    %v544 = vunpack.c.h.b16 %v451
    %v545 = vunpack.c.l.b16 %v452
    %v546 = vunpack.c.h.b16 %v452
    %v547 = vunpack.c.l.b16 %v453
    %v548 = vunpack.c.h.b16 %v453
    %v549 = vunpack.c.l.b16 %v454
    %v550 = vunpack.c.h.b16 %v454
    %v551 = vunpack.c.l.b16 %v455
    %v552 = vunpack.c.h.b16 %v455
    %v553 = vpack.c.b16 %v491, %v489
    %v554 = vpack.c.b16 %v492, %v490
    %v555 = vpack.c.b16 %v495, %v493
    %v556 = vpack.c.b16 %v496, %v494
    %v557 = vpack.c.b16 %v499, %v497
    %v558 = vpack.c.b16 %v500, %v498
    %v559 = vpack.c.b16 %v503, %v501
    %v560 = vpack.c.b16 %v504, %v502
    %v561 = vpack.c.b16 %v507, %v505
    %v562 = vpack.c.b16 %v508, %v506
    %v563 = vpack.c.b16 %v511, %v509
    %v564 = vpack.c.b16 %v512, %v510
    %v565 = vpack.c.b16 %v515, %v513
    %v566 = vpack.c.b16 %v516, %v514
    %v567 = vpack.c.b16 %v519, %v517
    %v568 = vpack.c.b16 %v520, %v518
    %v569 = vpack.c.b16 %v523, %v521
    %v570 = vpack.c.b16 %v524, %v522
    %v571 = vpack.c.b16 %v527, %v525
    %v572 = vpack.c.b16 %v528, %v526
    %v573 = vpack.c.b16 %v531, %v529
    %v574 = vpack.c.b16 %v532, %v530
    %v575 = vpack.c.b16 %v535, %v533
    %v576 = vpack.c.b16 %v536, %v534
    %v577 = vpack.c.b16 %v539, %v537
    %v578 = vpack.c.b16 %v540, %v538
    %v579 = vpack.c.b16 %v543, %v541
    %v580 = vpack.c.b16 %v544, %v542
    %v581 = vpack.c.b16 %v547, %v545
    %v582 = vpack.c.b16 %v548, %v546
    %v583 = vpack.c.b16 %v551, %v549
    %v584 = vpack.c.b16 %v552, %v550
    %v618 = vperm.slane %v456, 0
    %v619 = vperm.slane %v456, 1
    %622 = vmatpush.bf16.msra.mxu0 %v567
    %623 = vmatpush.bf16.msra.mxu0 %v565
    %624 = vmatpush.bf16.msra.mxu0 %v563
    %625 = vmatpush.bf16.msra.mxu0 %v561
    %626 = vmatpush.bf16.msra.mxu0 %v559
    %627 = vmatpush.bf16.msra.mxu0 %v557
    %628 = vmatpush.bf16.msra.mxu0 %v555
    %629 = vmatpush.bf16.msra.mxu0 %v553
    %630 = vmatmul.bf16.gmra.mxu0 %v422
    %v631 = vpop.f32.mrf.mxu0
    %v632 = vadd.f32 %v618, %v631
    %v633 = vpop.f32.mrf.mxu0
    %634 = vdwg.mxu0
    %635 = vmatpush.bf16.msra.mxu0 %v583
    %636 = vmatpush.bf16.msra.mxu0 %v581
    %637 = vmatpush.bf16.msra.mxu0 %v579
    %638 = vmatpush.bf16.msra.mxu0 %v577
    %639 = vmatpush.bf16.msra.mxu0 %v575
    %640 = vmatpush.bf16.msra.mxu0 %v573
    %641 = vmatpush.bf16.msra.mxu0 %v571
    %642 = vmatpush.bf16.msra.mxu0 %v569
    %643 = vmatmul.bf16.gmra.mxu0 %v423
    %v644 = vpop.f32.mrf.mxu0
    %v645 = vadd.f32 %v632, %v644
    %v646 = vpop.f32.mrf.mxu0
    %647 = vdwg.mxu0
    %648 = vmatpush.bf16.msra.mxu0 %v568
    %649 = vmatpush.bf16.msra.mxu0 %v566
    %650 = vmatpush.bf16.msra.mxu0 %v564
    %651 = vmatpush.bf16.msra.mxu0 %v562
    %652 = vmatpush.bf16.msra.mxu0 %v560
    %653 = vmatpush.bf16.msra.mxu0 %v558
    %654 = vmatpush.bf16.msra.mxu0 %v556
    %655 = vmatpush.bf16.msra.mxu0 %v554
    %656 = vmatmul.bf16.gmra.mxu0 %v422
    %v657 = vpop.f32.mrf.mxu0
    %v658 = vadd.f32 %v619, %v657
    %v659 = vpop.f32.mrf.mxu0
    %660 = vdwg.mxu0
    %661 = vmatpush.bf16.msra.mxu0 %v584
    %662 = vmatpush.bf16.msra.mxu0 %v582
    %663 = vmatpush.bf16.msra.mxu0 %v580
    %664 = vmatpush.bf16.msra.mxu0 %v578
    %665 = vmatpush.bf16.msra.mxu0 %v576
    %666 = vmatpush.bf16.msra.mxu0 %v574
    %667 = vmatpush.bf16.msra.mxu0 %v572
    %668 = vmatpush.bf16.msra.mxu0 %v570
    %669 = vmatmul.bf16.gmra.mxu0 %v423
    %v670 = vpop.f32.mrf.mxu0
    %v671 = vadd.f32 %v658, %v670
    %v672 = vpop.f32.mrf.mxu0
    %673 = vdwg.mxu0
    %v674 = vmax.f32 %v645, 0.0
    %v675 = vmax.f32 %v671, 0.0
    %v676 = vpack.c.bf16 %v674, %v674
    %v677 = vpack.c.bf16 %v675, %v675
    %v678 = vld [vmem:[#allocation8] sm:$0xff]
    %v679 = vld [vmem:[#allocation8 + $0x8] sm:$0xff]
    %v680 = vld [vmem:[#allocation8 + $0x10] sm:$0xff]
    %v681 = vld [vmem:[#allocation8 + $0x18] sm:$0xff]
    %v682 = vld [vmem:[#allocation8 + $0x20] sm:$0xff]
    %v683 = vld [vmem:[#allocation8 + $0x28] sm:$0xff]
    %v684 = vld [vmem:[#allocation8 + $0x30] sm:$0xff]
    %v685 = vld [vmem:[#allocation8 + $0x38] sm:$0xff]
    %v686 = vld [vmem:[#allocation8 + $0x40] sm:$0xff]
    %v687 = vld [vmem:[#allocation8 + $0x48] sm:$0xff]
    %v688 = vld [vmem:[#allocation8 + $0x50] sm:$0xff]
    %v689 = vld [vmem:[#allocation8 + $0x58] sm:$0xff]
    %v690 = vld [vmem:[#allocation8 + $0x60] sm:$0xff]
    %v691 = vld [vmem:[#allocation8 + $0x68] sm:$0xff]
    %v692 = vld [vmem:[#allocation8 + $0x70] sm:$0xff]
    %v693 = vld [vmem:[#allocation8 + $0x78] sm:$0xff]
    %v694 = vld [vmem:[#allocation8 + $0x80] sm:$0xff]
    %v695 = vld [vmem:[#allocation8 + $0x88] sm:$0xff]
    %v696 = vld [vmem:[#allocation8 + $0x90] sm:$0xff]
    %v697 = vld [vmem:[#allocation8 + $0x98] sm:$0xff]
    %v698 = vld [vmem:[#allocation8 + $0xa0] sm:$0xff]
    %v699 = vld [vmem:[#allocation8 + $0xa8] sm:$0xff]
    %v700 = vld [vmem:[#allocation8 + $0xb0] sm:$0xff]
    %v701 = vld [vmem:[#allocation8 + $0xb8] sm:$0xff]
    %v702 = vld [vmem:[#allocation8 + $0xc0] sm:$0xff]
    %v703 = vld [vmem:[#allocation8 + $0xc8] sm:$0xff]
    %v704 = vld [vmem:[#allocation8 + $0xd0] sm:$0xff]
    %v705 = vld [vmem:[#allocation8 + $0xd8] sm:$0xff]
    %v706 = vld [vmem:[#allocation8 + $0xe0] sm:$0xff]
    %v707 = vld [vmem:[#allocation8 + $0xe8] sm:$0xff]
    %v708 = vld [vmem:[#allocation8 + $0xf0] sm:$0xff]
    %v709 = vld [vmem:[#allocation8 + $0xf8] sm:$0xff]
    %v710 = vld [vmem:[%s8] sm:$0x3]
    %v743 = vunpack.c.l.b16 %v678
    %v744 = vunpack.c.h.b16 %v678
    %v745 = vunpack.c.l.b16 %v679
    %v746 = vunpack.c.h.b16 %v679
    %v747 = vunpack.c.l.b16 %v680
    %v748 = vunpack.c.h.b16 %v680
    %v749 = vunpack.c.l.b16 %v681
    %v750 = vunpack.c.h.b16 %v681
    %v751 = vunpack.c.l.b16 %v682
    %v752 = vunpack.c.h.b16 %v682
    %v753 = vunpack.c.l.b16 %v683
    %v754 = vunpack.c.h.b16 %v683
    %v755 = vunpack.c.l.b16 %v684
    %v756 = vunpack.c.h.b16 %v684
    %v757 = vunpack.c.l.b16 %v685
    %v758 = vunpack.c.h.b16 %v685
    %v759 = vunpack.c.l.b16 %v686
    %v760 = vunpack.c.h.b16 %v686
    %v761 = vunpack.c.l.b16 %v687
    %v762 = vunpack.c.h.b16 %v687
    %v763 = vunpack.c.l.b16 %v688
    %v764 = vunpack.c.h.b16 %v688
    %v765 = vunpack.c.l.b16 %v689
    %v766 = vunpack.c.h.b16 %v689
    %v767 = vunpack.c.l.b16 %v690
    %v768 = vunpack.c.h.b16 %v690
    %v769 = vunpack.c.l.b16 %v691
    %v770 = vunpack.c.h.b16 %v691
    %v771 = vunpack.c.l.b16 %v692
    %v772 = vunpack.c.h.b16 %v692
    %v773 = vunpack.c.l.b16 %v693
    %v774 = vunpack.c.h.b16 %v693
    %v775 = vunpack.c.l.b16 %v694
    %v776 = vunpack.c.h.b16 %v694
    %v777 = vunpack.c.l.b16 %v695
    %v778 = vunpack.c.h.b16 %v695
    %v779 = vunpack.c.l.b16 %v696
    %v780 = vunpack.c.h.b16 %v696
    %v781 = vunpack.c.l.b16 %v697
    %v782 = vunpack.c.h.b16 %v697
    %v783 = vunpack.c.l.b16 %v698
    %v784 = vunpack.c.h.b16 %v698
    %v785 = vunpack.c.l.b16 %v699
    %v786 = vunpack.c.h.b16 %v699
    %v787 = vunpack.c.l.b16 %v700
    %v788 = vunpack.c.h.b16 %v700
    %v789 = vunpack.c.l.b16 %v701
    %v790 = vunpack.c.h.b16 %v701
    %v791 = vunpack.c.l.b16 %v702
    %v792 = vunpack.c.h.b16 %v702
    %v793 = vunpack.c.l.b16 %v703
    %v794 = vunpack.c.h.b16 %v703
    %v795 = vunpack.c.l.b16 %v704
    %v796 = vunpack.c.h.b16 %v704
    %v797 = vunpack.c.l.b16 %v705
    %v798 = vunpack.c.h.b16 %v705
    %v799 = vunpack.c.l.b16 %v706
    %v800 = vunpack.c.h.b16 %v706
    %v801 = vunpack.c.l.b16 %v707
    %v802 = vunpack.c.h.b16 %v707
    %v803 = vunpack.c.l.b16 %v708
    %v804 = vunpack.c.h.b16 %v708
    %v805 = vunpack.c.l.b16 %v709
    %v806 = vunpack.c.h.b16 %v709
    %v807 = vpack.c.b16 %v745, %v743
    %v808 = vpack.c.b16 %v746, %v744
    %v809 = vpack.c.b16 %v749, %v747
    %v810 = vpack.c.b16 %v750, %v748
    %v811 = vpack.c.b16 %v753, %v751
    %v812 = vpack.c.b16 %v754, %v752
    %v813 = vpack.c.b16 %v757, %v755
    %v814 = vpack.c.b16 %v758, %v756
    %v815 = vpack.c.b16 %v761, %v759
    %v816 = vpack.c.b16 %v762, %v760
    %v817 = vpack.c.b16 %v765, %v763
    %v818 = vpack.c.b16 %v766, %v764
    %v819 = vpack.c.b16 %v769, %v767
    %v820 = vpack.c.b16 %v770, %v768
    %v821 = vpack.c.b16 %v773, %v771
    %v822 = vpack.c.b16 %v774, %v772
    %v823 = vpack.c.b16 %v777, %v775
    %v824 = vpack.c.b16 %v778, %v776
    %v825 = vpack.c.b16 %v781, %v779
    %v826 = vpack.c.b16 %v782, %v780
    %v827 = vpack.c.b16 %v785, %v783
    %v828 = vpack.c.b16 %v786, %v784
    %v829 = vpack.c.b16 %v789, %v787
    %v830 = vpack.c.b16 %v790, %v788
    %v831 = vpack.c.b16 %v793, %v791
    %v832 = vpack.c.b16 %v794, %v792
    %v833 = vpack.c.b16 %v797, %v795
    %v834 = vpack.c.b16 %v798, %v796
    %v835 = vpack.c.b16 %v801, %v799
    %v836 = vpack.c.b16 %v802, %v800
    %v837 = vpack.c.b16 %v805, %v803
    %v838 = vpack.c.b16 %v806, %v804
    %v872 = vperm.slane %v710, 0
    %v873 = vperm.slane %v710, 1
    %876 = vmatpush.bf16.msra.mxu0 %v821
    %877 = vmatpush.bf16.msra.mxu0 %v819
    %878 = vmatpush.bf16.msra.mxu0 %v817
    %879 = vmatpush.bf16.msra.mxu0 %v815
    %880 = vmatpush.bf16.msra.mxu0 %v813
    %881 = vmatpush.bf16.msra.mxu0 %v811
    %882 = vmatpush.bf16.msra.mxu0 %v809
    %883 = vmatpush.bf16.msra.mxu0 %v807
    %884 = vmatmul.bf16.gmra.mxu0 %v676
    %v885 = vpop.f32.mrf.mxu0
    %v886 = vadd.f32 %v872, %v885
    %v887 = vpop.f32.mrf.mxu0
    %888 = vdwg.mxu0
    %889 = vmatpush.bf16.msra.mxu0 %v837
    %890 = vmatpush.bf16.msra.mxu0 %v835
    %891 = vmatpush.bf16.msra.mxu0 %v833
    %892 = vmatpush.bf16.msra.mxu0 %v831
    %893 = vmatpush.bf16.msra.mxu0 %v829
    %894 = vmatpush.bf16.msra.mxu0 %v827
    %895 = vmatpush.bf16.msra.mxu0 %v825
    %896 = vmatpush.bf16.msra.mxu0 %v823
    %897 = vmatmul.bf16.gmra.mxu0 %v677
    %v898 = vpop.f32.mrf.mxu0
    %v899 = vadd.f32 %v886, %v898
    %v900 = vpop.f32.mrf.mxu0
    %901 = vdwg.mxu0
    %902 = vmatpush.bf16.msra.mxu0 %v822
    %903 = vmatpush.bf16.msra.mxu0 %v820
    %904 = vmatpush.bf16.msra.mxu0 %v818
    %905 = vmatpush.bf16.msra.mxu0 %v816
    %906 = vmatpush.bf16.msra.mxu0 %v814
    %907 = vmatpush.bf16.msra.mxu0 %v812
    %908 = vmatpush.bf16.msra.mxu0 %v810
    %909 = vmatpush.bf16.msra.mxu0 %v808
    %910 = vmatmul.bf16.gmra.mxu0 %v676
    %v911 = vpop.f32.mrf.mxu0
    %v912 = vadd.f32 %v873, %v911
    %v913 = vpop.f32.mrf.mxu0
    %914 = vdwg.mxu0
    %915 = vmatpush.bf16.msra.mxu0 %v838
    %916 = vmatpush.bf16.msra.mxu0 %v836
    %917 = vmatpush.bf16.msra.mxu0 %v834
    %918 = vmatpush.bf16.msra.mxu0 %v832
    %919 = vmatpush.bf16.msra.mxu0 %v830
    %920 = vmatpush.bf16.msra.mxu0 %v828
    %921 = vmatpush.bf16.msra.mxu0 %v826
    %922 = vmatpush.bf16.msra.mxu0 %v824
    %923 = vmatmul.bf16.gmra.mxu0 %v677
    %v924 = vpop.f32.mrf.mxu0
    %v925 = vadd.f32 %v912, %v924
    %v926 = vpop.f32.mrf.mxu0
    %927 = vdwg.mxu0
    %v928 = vmax.f32 %v899, 0.0
    %v929 = vmax.f32 %v925, 0.0
    %v930 = vpack.c.bf16 %v928, %v928
    %v931 = vpack.c.bf16 %v929, %v929
    %v932 = vld [vmem:[%s9] sm:$0xf]
    %v933 = vld [vmem:[%s9 + $0x4] sm:$0xf]
    %v934 = vld [vmem:[%s9 + $0x8] sm:$0xf]
    %v935 = vld [vmem:[%s9 + $0xc] sm:$0xf]
    %v936 = vld [vmem:[%s9 + $0x10] sm:$0xf]
    %v937 = vld [vmem:[%s9 + $0x14] sm:$0xf]
    %v938 = vld [vmem:[%s9 + $0x18] sm:$0xf]
    %v939 = vld [vmem:[%s9 + $0x1c] sm:$0xf]
    %v940 = vld [vmem:[%s9 + $0x20] sm:$0xf]
    %v941 = vld [vmem:[%s9 + $0x24] sm:$0xf]
    %v942 = vld [vmem:[%s9 + $0x28] sm:$0xf]
    %v943 = vld [vmem:[%s9 + $0x2c] sm:$0xf]
    %v944 = vld [vmem:[%s9 + $0x30] sm:$0xf]
    %v945 = vld [vmem:[%s9 + $0x34] sm:$0xf]
    %v946 = vld [vmem:[%s9 + $0x38] sm:$0xf]
    %v947 = vld [vmem:[%s9 + $0x3c] sm:$0xf]
    %v948 = vld [vmem:[%s9 + $0x40] sm:$0xf]
    %v949 = vld [vmem:[%s9 + $0x44] sm:$0xf]
    %v950 = vld [vmem:[%s9 + $0x48] sm:$0xf]
    %v951 = vld [vmem:[%s9 + $0x4c] sm:$0xf]
    %v952 = vld [vmem:[%s9 + $0x50] sm:$0xf]
    %v953 = vld [vmem:[%s9 + $0x54] sm:$0xf]
    %v954 = vld [vmem:[%s9 + $0x58] sm:$0xf]
    %v955 = vld [vmem:[%s9 + $0x5c] sm:$0xf]
    %v956 = vld [vmem:[%s9 + $0x60] sm:$0xf]
    %v957 = vld [vmem:[%s9 + $0x64] sm:$0xf]
    %v958 = vld [vmem:[%s9 + $0x68] sm:$0xf]
    %v959 = vld [vmem:[%s9 + $0x6c] sm:$0xf]
    %v960 = vld [vmem:[%s9 + $0x70] sm:$0xf]
    %v961 = vld [vmem:[%s9 + $0x74] sm:$0xf]
    %v962 = vld [vmem:[%s9 + $0x78] sm:$0xf]
    %v963 = vld [vmem:[%s9 + $0x7c] sm:$0xf]
    %v964 = vld [vmem:[%s10] sm:$0x1]
    %v997 = vunpack.c.l.b16 %v932
    %v998 = vunpack.c.l.b16 %v933
    %v999 = vunpack.c.l.b16 %v934
    %v1000 = vunpack.c.l.b16 %v935
    %v1001 = vunpack.c.l.b16 %v936
    %v1002 = vunpack.c.l.b16 %v937
    %v1003 = vunpack.c.l.b16 %v938
    %v1004 = vunpack.c.l.b16 %v939
    %v1005 = vunpack.c.l.b16 %v940
    %v1006 = vunpack.c.l.b16 %v941
    %v1007 = vunpack.c.l.b16 %v942
    %v1008 = vunpack.c.l.b16 %v943
    %v1009 = vunpack.c.l.b16 %v944
    %v1010 = vunpack.c.l.b16 %v945
    %v1011 = vunpack.c.l.b16 %v946
    %v1012 = vunpack.c.l.b16 %v947
    %v1013 = vunpack.c.l.b16 %v948
    %v1014 = vunpack.c.l.b16 %v949
    %v1015 = vunpack.c.l.b16 %v950
    %v1016 = vunpack.c.l.b16 %v951
    %v1017 = vunpack.c.l.b16 %v952
    %v1018 = vunpack.c.l.b16 %v953
    %v1019 = vunpack.c.l.b16 %v954
    %v1020 = vunpack.c.l.b16 %v955
    %v1021 = vunpack.c.l.b16 %v956
    %v1022 = vunpack.c.l.b16 %v957
    %v1023 = vunpack.c.l.b16 %v958
    %v1024 = vunpack.c.l.b16 %v959
    %v1025 = vunpack.c.l.b16 %v960
    %v1026 = vunpack.c.l.b16 %v961
    %v1027 = vunpack.c.l.b16 %v962
    %v1028 = vunpack.c.l.b16 %v963
    %v1029 = vpack.c.b16 %v998, %v997
    %v1030 = vpack.c.b16 %v1000, %v999
    %v1031 = vpack.c.b16 %v1002, %v1001
    %v1032 = vpack.c.b16 %v1004, %v1003
    %v1033 = vpack.c.b16 %v1006, %v1005
    %v1034 = vpack.c.b16 %v1008, %v1007
    %v1035 = vpack.c.b16 %v1010, %v1009
    %v1036 = vpack.c.b16 %v1012, %v1011
    %v1037 = vpack.c.b16 %v1014, %v1013
    %v1038 = vpack.c.b16 %v1016, %v1015
    %v1039 = vpack.c.b16 %v1018, %v1017
    %v1040 = vpack.c.b16 %v1020, %v1019
    %v1041 = vpack.c.b16 %v1022, %v1021
    %v1042 = vpack.c.b16 %v1024, %v1023
    %v1043 = vpack.c.b16 %v1026, %v1025
    %v1044 = vpack.c.b16 %v1028, %v1027
    %1061 = vmatpush.bf16.msra.mxu0 %v1036
    %1062 = vmatpush.bf16.msra.mxu0 %v1035
    %1063 = vmatpush.bf16.msra.mxu0 %v1034
    %1064 = vmatpush.bf16.msra.mxu0 %v1033
    %1065 = vmatpush.bf16.msra.mxu0 %v1032
    %1066 = vmatpush.bf16.msra.mxu0 %v1031
    %1067 = vmatpush.bf16.msra.mxu0 %v1030
    %1068 = vmatpush.bf16.msra.mxu0 %v1029
    %1069 = vmatmul.bf16.gmra.mxu0 %v930
    %v1070 = vpop.f32.mrf.mxu0
    %v1071 = vadd.f32 %v964, %v1070
    %v1072 = vpop.f32.mrf.mxu0
    %1073 = vdwg.mxu0
    %1074 = vmatpush.bf16.msra.mxu0 %v1044
    %1075 = vmatpush.bf16.msra.mxu0 %v1043
    %1076 = vmatpush.bf16.msra.mxu0 %v1042
    %1077 = vmatpush.bf16.msra.mxu0 %v1041
    %1078 = vmatpush.bf16.msra.mxu0 %v1040
    %1079 = vmatpush.bf16.msra.mxu0 %v1039
    %1080 = vmatpush.bf16.msra.mxu0 %v1038
    %1081 = vmatpush.bf16.msra.mxu0 %v1037
    %1082 = vmatmul.bf16.gmra.mxu0 %v931
    %v1083 = vpop.f32.mrf.mxu0
    %v1084 = vadd.f32 %v1071, %v1083
    %v1085 = vpop.f32.mrf.mxu0
    %1086 = vdwg.mxu0
    %vm1087 = vcmask 24576
    %1088 = vst.msk [vmem:[#allocation2] sm:$0x1] %vm1087, %v1084
    %1090 = vrot.lane.b32.xlu0 %v1084, 124
    %v1091 = vpop.permute.xlu0 %1090
    %1093 = vst.msk [vmem:[#allocation2 + $0x1] sm:$0x1] %vm1087, %v1091
    %1094 = vrot.lane.b32.xlu0 %v1084, 120
    %v1095 = vpop.permute.xlu0 %1094
    %1097 = vst.msk [vmem:[#allocation2 + $0x2] sm:$0x1] %vm1087, %v1095
    %1098 = vrot.lane.b32.xlu0 %v1084, 116
    %v1099 = vpop.permute.xlu0 %1098
    %1101 = vst.msk [vmem:[#allocation2 + $0x3] sm:$0x1] %vm1087, %v1099
    %1102 = vrot.lane.b32.xlu0 %v1084, 112
    %v1103 = vpop.permute.xlu0 %1102
    %1105 = vst.msk [vmem:[#allocation2 + $0x4] sm:$0x1] %vm1087, %v1103
    %1106 = vrot.lane.b32.xlu0 %v1084, 108
    %v1107 = vpop.permute.xlu0 %1106
    %1109 = vst.msk [vmem:[#allocation2 + $0x5] sm:$0x1] %vm1087, %v1107
    %1110 = vrot.lane.b32.xlu0 %v1084, 104
    %v1111 = vpop.permute.xlu0 %1110
    %1113 = vst.msk [vmem:[#allocation2 + $0x6] sm:$0x1] %vm1087, %v1111
    %1114 = vrot.lane.b32.xlu0 %v1084, 100
    %v1115 = vpop.permute.xlu0 %1114
    %1117 = vst.msk [vmem:[#allocation2 + $0x7] sm:$0x1] %vm1087, %v1115
    %v1118 = vld [vmem:[#allocation2] sm:$0xff]
    %vm1119 = vcmask 31744
    %v1120 = vsel %vm1119, %v1118, -inf
    %1121 = vmax.xlane.f32.xlu0 %v1120
    %v1122 = vpop.xlane.xlu0 %1121
    %v1123 = vsub.f32 %v1118, %v1122
    %v1124 = vmul.f32 %v1123, 1.442695
    %v1125 = vpow.pop %v1124
    %v1126 = vsel %vm1119, %v1125, 0.0
    %1127 = vadd.xlane.f32.xlu0 %v1126
    %v1128 = vpop.xlane.xlu0 %1127
    %v1129 = vrcp.pop %v1128
    %v1130 = vmul.f32 %v1128, %v1129
    %v1131 = vsub.f32 1.0, %v1130
    %v1132 = vmul.f32 %v1129, %v1131
    %v1133 = vadd.f32 %v1129, %v1132
    %vm1134 = vweird.f32 %v1128
    %vm1135 = vweird.f32 %v1129
    %vm1136 = vmor %vm1134, %vm1135
    %v1137 = vsel %vm1136, %v1129, %v1133
    %v1138 = vand.u32 2147483647, %v1128
    %vm1139 = vcmp.eq.f32.partialorder %v1138, 8.507059e+37
    %v1140 = vand.u32 %v1128, 2147483648
    %v1141 = vor.u32 1.1754944e-38, %v1140
    %v1142 = vsel %vm1139, %v1141, %v1137
    %v1143 = vmul.f32 %v1125, %v1142
    %1144 = vst.msk [vmem:[%s11] sm:$0xff] %vm1119, %v1143
    %v1145 = vmul.f32 %v1143, 10000.0
    %v1146 = vsel %vm1119, %v1145, -inf
    %1147 = vmax.xlane.f32.xlu0 %v1146
    %v1148 = vpop.xlane.xlu0 %1147
    %v1149 = vsub.f32 %v1145, %v1148
    %v1150 = vmul.f32 %v1149, 1.442695
    %v1151 = vpow.pop %v1150
    %v1152 = vsel %vm1119, %v1151, 0.0
    %1153 = vadd.xlane.f32.xlu0 %v1152
    %v1154 = vpop.xlane.xlu0 %1153
    %v1155 = vrcp.pop %v1154
    %v1156 = vmul.f32 %v1151, %v1155
    %1157 = vst.msk [vmem:[%s12] sm:$0xff] %vm1119, %v1156
    %v1158 = vsel %vm1119, %v1143, -inf
    %1159 = vmax.xlane.f32.xlu0 %v1158
    %v1160 = vpop.xlane.xlu0 %1159
    %v1161 = vsub.f32 %v1143, %v1160
    %v1162 = vmul.f32 %v1161, 1.442695
    %v1163 = vpow.pop %v1162
    %v1164 = vsel %vm1119, %v1163, 0.0
    %1165 = vadd.xlane.f32.xlu0 %v1164
    %v1166 = vpop.xlane.xlu0 %1165
    %v1167 = vrcp.pop %v1166
    %v1168 = vmul.f32 %v1163, %v1167
    %1169 = vst.msk [vmem:[%s13] sm:$0xff] %vm1119, %v1168
    %v1170 = vsub.f32 0.0, %v1084
    %v1171 = vmul.f32 %v1170, 1.442695
    %v1172 = vpow.pop %v1171
    %v1173 = vadd.f32 %v1172, 1.0
    %v1174 = vrcp.pop %v1173
    %1176 = vrot.lane.b32.xlu0 %v1174, 96
    %v1177 = vpop.permute.xlu0 %1176
    %1179 = vst.msk [vmem:[#allocation9] sm:$0x1] %vm1087, %v1177
    // Predicated region
    $region58: #{tpu_custom_call.1} parent=1 // pred_check
      _
    $region59: #{tpu_custom_call.1} parent=1 // pred_check_branch
      %1181 = sbr.rel (0) target = $region61
    $region60: #{tpu_custom_call.1} parent=1 // pred_region
      _
    $region61: #{tpu_custom_call.1} parent=1 // pred_fallthru
      _
    // Predicated region
    $region62: #{tpu_custom_call.1} parent=1 // pred_check
      _
    $region63: #{tpu_custom_call.1} parent=1 // pred_check_branch
      %1183 = sbr.rel (0) target = $region65
    $region64: #{tpu_custom_call.1} parent=1 // pred_region
      _
    $region65: #{tpu_custom_call.1} parent=1 // pred_fallthru
      _
    // Predicated region
    $region66: #{tpu_custom_call.1} parent=1 // pred_check
      _
    $region67: #{tpu_custom_call.1} parent=1 // pred_check_branch
      %1185 = sbr.rel (0) target = $region69
    $region68: #{tpu_custom_call.1} parent=1 // pred_region
      _
    $region69: #{tpu_custom_call.1} parent=1 // pred_fallthru
      _
    // Predicated region
    $region70: #{tpu_custom_call.1} parent=1 // pred_check
      _
    $region71: #{tpu_custom_call.1} parent=1 // pred_check_branch
      %1187 = sbr.rel (0) target = $region73
    $region72: #{tpu_custom_call.1} parent=1 // pred_region
      %1189 = vsyncadd [#allocation5], 0
      %s1191 = sshll.u32 [#allocation9], 4
      %s1192 = int_to_ptr.vmem [resolvable:$true] %s1191
      %s1193 = sshll.u32 %s14, 4
      %s1194 = int_to_ptr.hbm [resolvable:$true] %s1193
      %1196 = dma.vmem_to_hbm [thread:$0]  %s1192, 16, %s1194, [#allocation5]
    $region73: #{tpu_custom_call.1} parent=1 // pred_fallthru
      _
    // Predicated region
    $region74: #{tpu_custom_call.1} parent=1 // pred_check
      _
    $region75: #{tpu_custom_call.1} parent=1 // pred_check_branch
      %1198 = sbr.rel (0) target = $region77
    $region76: #{tpu_custom_call.1} parent=1 // pred_region
      _
    $region77: #{tpu_custom_call.1} parent=1 // pred_fallthru
      _
    // Predicated region
    $region78: #{tpu_custom_call.1} parent=1 // pred_check
      _
    $region79: #{tpu_custom_call.1} parent=1 // pred_check_branch
      %1200 = sbr.rel (0) target = $region81
    $region80: #{tpu_custom_call.1} parent=1 // pred_region
      _
    $region81: #{tpu_custom_call.1} parent=1 // pred_fallthru
      _
    // Predicated region
    $region82: #{tpu_custom_call.1} parent=1 // pred_check
      _
    $region83: #{tpu_custom_call.1} parent=1 // pred_check_branch
      %1202 = sbr.rel (0) target = $region85
    $region84: #{tpu_custom_call.1} parent=1 // pred_region
      _
    $region85: #{tpu_custom_call.1} parent=1 // pred_fallthru
      _
    // Predicated region
    $region86: #{tpu_custom_call.1} parent=1 // pred_check
      _
    $region87: #{tpu_custom_call.1} parent=1 // pred_check_branch
      %1204 = sbr.rel (0) target = $region89
    $region88: #{tpu_custom_call.1} parent=1 // pred_region
      %1206 = dma.done [#allocation5], 16
    $region89: #{tpu_custom_call.1} parent=1 // pred_fallthru
      _
    %1207 = vsyncpa [#allocation4], 1
    %1208 = vsyncpa [#allocation7], 1
    %1209 = vsyncpa [#allocation5], 1

</llo_original>
